<compile_context>
chip_gen: v7x
topology: tpu7x:2x2x1
jax: 0.10.0
libtpu: 0.0.40
codegen_flags: <defaults>
</compile_context>

<pallas_src>
import functools

import jax
import jax.numpy as jnp
from jax.experimental import pallas as pl
from jax.experimental.pallas import tpu as pltpu

_LANE = 128


def _excite(y_f32, w1t_ref, w2t_ref):
    """y_f32: (1, C) pooled mean -> sigmoid(relu(y @ W1t) @ W2t): (1, C) f32."""
    w1t = w1t_ref[...].astype(jnp.float32)        # (C, H)
    w2t = w2t_ref[...].astype(jnp.float32)        # (H, C)
    h = jnp.dot(y_f32, w1t, preferred_element_type=jnp.float32)   # (1, H)
    h = jnp.maximum(h, 0.0)
    s = jnp.dot(h, w2t, preferred_element_type=jnp.float32)       # (1, C)
    return jax.nn.sigmoid(s)


def _se_kernel_single(x_ref, w1t_ref, w2t_ref, o_ref, *, inv_l):
    """Single-pass kernel: one batch element per grid step, whole (1, C, Lp) slab.

    x_ref/o_ref: (1, C, Lp); w1t_ref: (C, H); w2t_ref: (H, C).
    """
    x = x_ref[...]                                               # native dtype
    # Squeeze: f32-accumulated sum over L; divide by the TRUE (unpadded) L.
    y = jnp.sum(x, axis=-1, dtype=jnp.float32) * inv_l           # (1, C)
    s = _excite(y, w1t_ref, w2t_ref)                             # (1, C) f32
    # Scale: only the tiny (1, C) scale is cast; x stays in its native dtype.
    o_ref[...] = (x * s[:, :, None].astype(x.dtype)).astype(o_ref.dtype)


def _se_kernel_two_phase(x_ref, w1t_ref, w2t_ref, o_ref, acc_ref, *, inv_l):
    """Two-phase kernel for slabs that do not fit VMEM. Grid = (B, 2, NLT).

    Phase 0 (p == 0): accumulate per-channel f32 sums over L tiles; on the
    last tile compute the sigmoid scale and stash it in the scratch.
    Phase 1 (p == 1): re-read each L tile and write the scaled output.
    The output index_map maps all phase-0 steps onto block (b, 0, 0), which is
    only flushed after phase 1 has written it, so no partial tiles ever land
    in HBM.
    """
    p = pl.program_id(1)
    l = pl.program_id(2)
    nlt = pl.num_programs(2)

    @pl.when(jnp.logical_and(p == 0, l == 0))
    def _():
        acc_ref[...] = jnp.zeros_like(acc_ref)

    @pl.when(p == 0)
    def _():
        acc_ref[...] += jnp.sum(x_ref[...], axis=-1, dtype=jnp.float32)

    @pl.when(jnp.logical_and(p == 0, l == nlt - 1))
    def _():
        y = acc_ref[...] * inv_l                   # mean over the true L
        acc_ref[...] = _excite(y, w1t_ref, w2t_ref)  # reuse scratch as the scale

    @pl.when(p == 1)
    def _():
        x = x_ref[...]
        s = acc_ref[...].astype(x.dtype)           # (1, C)
        o_ref[...] = (x * s[:, :, None]).astype(o_ref.dtype)


def se_layer(x, w1, w2, *, vmem_budget_bytes=28 * 1024 * 1024):
    """Squeeze-and-Excitation forward.

    x: (B, C, L); w1: (H, C) [fc1 weight]; w2: (C, H) [fc2 weight].
    Returns (B, C, L), same dtype as x.

    vmem_budget_bytes bounds the double-buffered per-step payload; the default
    (28 MiB) is safe on v5e / v6e / v7x. Raise it on v5e/v6e (128 MiB VMEM)
    for larger lane-dense tiles.
    """
    B, C, L = x.shape
    H = w1.shape[0]
    assert w1.shape == (H, C) and w2.shape == (C, H), (w1.shape, w2.shape)

    # Pre-transpose weights ONCE in XLA so the kernel does plain row-major dots.
    w1t = w1.T    # (C, H)
    w2t = w2.T    # (H, C)

    itemsize = x.dtype.itemsize
    weight_bytes = 2 * C * H * w1.dtype.itemsize
    lp_full = ((L + _LANE - 1) // _LANE) * _LANE          # lane-dense L

    # Double-buffered in + out payload for a full per-batch slab.
    single_pass_bytes = 4 * C * lp_full * itemsize + weight_bytes
    vmem_limit = int(max(vmem_budget_bytes + (8 << 20), 32 << 20))

    if single_pass_bytes <= vmem_budget_bytes:
        # ---- Path A: one (1, C, Lp) slab per batch element, grid over B. ----
        lp = lp_full
        x_p = x if lp == L else jnp.pad(x, ((0, 0), (0, 0), (0, lp - L)))
        out = pl.pallas_call(
            functools.partial(_se_kernel_single, inv_l=1.0 / L),
            out_shape=jax.ShapeDtypeStruct((B, C, lp), x.dtype),
            grid=(B,),
            in_specs=[
                pl.BlockSpec((1, C, lp), lambda b: (b, 0, 0)),
                pl.BlockSpec((C, H), lambda b: (0, 0)),   # resident weights
                pl.BlockSpec((H, C), lambda b: (0, 0)),
            ],
            out_specs=pl.BlockSpec((1, C, lp), lambda b: (b, 0, 0)),
            compiler_params=pltpu.CompilerParams(
                dimension_semantics=("parallel",),
                vmem_limit_bytes=vmem_limit,
            ),
        )(x_p, w1t, w2t)
    else:
        # ---- Path B: two-phase L tiling (large C*L, v7x-friendly). ----
        cols = max(int((vmem_budget_bytes - weight_bytes)
                       // (4 * C * itemsize * _LANE)), 1)
        lt = min(cols * _LANE, lp_full)                  # lane-dense tile
        lp = ((L + lt - 1) // lt) * lt
        nlt = lp // lt
        x_p = x if lp == L else jnp.pad(x, ((0, 0), (0, 0), (0, lp - L)))
        out = pl.pallas_call(
            functools.partial(_se_kernel_two_phase, inv_l=1.0 / L),
            out_shape=jax.ShapeDtypeStruct((B, C, lp), x.dtype),
            grid=(B, 2, nlt),
            in_specs=[
                pl.BlockSpec((1, C, lt), lambda b, p, l: (b, 0, l)),
                pl.BlockSpec((C, H), lambda b, p, l: (0, 0)),
                pl.BlockSpec((H, C), lambda b, p, l: (0, 0)),
            ],
            # Phase 0 parks on block (b, 0, 0); it is only flushed after
            # phase 1 writes it, so the reduction sweep never emits garbage.
            out_specs=pl.BlockSpec((1, C, lt), lambda b, p, l: (b, 0, p * l)),
            scratch_shapes=[pltpu.VMEM((1, C), jnp.float32)],
            compiler_params=pltpu.CompilerParams(
                dimension_semantics=("parallel", "arbitrary", "arbitrary"),
                vmem_limit_bytes=vmem_limit,
            ),
        )(x_p, w1t, w2t)

    return out if lp == L else out[:, :, :L]


def _reference(x, w1, w2):
    y = jnp.mean(x, axis=-1)
    y = jnp.maximum(y @ w1.T, 0.0)
    y = jax.nn.sigmoid(y @ w2.T)
    return x * y[:, :, None]


if __name__ == "__main__":
    key = jax.random.PRNGKey(0)
    kx, k1, k2, kx2, k1b, k2b = jax.random.split(key, 6)
    reduction = 4

    # --- Small demo shapes consistent with the module: x is (B, C, L). ---
    B, C, L = 2, 16, 16
    H = max(C // reduction, 4)
    x = jax.random.normal(kx, (B, C, L), dtype=jnp.float32)
    w1 = jax.random.normal(k1, (H, C), dtype=jnp.float32) * 0.1   # fc1: (H, C)
    w2 = jax.random.normal(k2, (C, H), dtype=jnp.float32) * 0.1   # fc2: (C, H)

    out = se_layer(x, w1, w2)                       # single-pass path
    jax.block_until_ready(out)
    ref = _reference(x, w1, w2)
    assert out.shape == (B, C, L)
    assert jnp.allclose(out, ref, atol=1e-5, rtol=1e-5)

    # --- Also exercise the two-phase L-tiled path (used for large C*L). ---
    B2, C2, L2 = 2, 128, 500
    H2 = max(C2 // reduction, 4)
    x2 = jax.random.normal(kx2, (B2, C2, L2), dtype=jnp.float32)
    w1b = jax.random.normal(k1b, (H2, C2), dtype=jnp.float32) * 0.05
    w2b = jax.random.normal(k2b, (C2, H2), dtype=jnp.float32) * 0.05
    out2 = se_layer(x2, w1b, w2b, vmem_budget_bytes=1 << 20)  # force tiling
    jax.block_until_ready(out2)
    ref2 = _reference(x2, w1b, w2b)
    assert out2.shape == (B2, C2, L2)
    assert jnp.allclose(out2, ref2, atol=1e-4, rtol=1e-4)

    print("KERNEL_OK")
</pallas_src>

<mosaic_0001>
module attributes {stable_mosaic.version = 11 : i64} {
  func.func @_se_kernel_single(%arg0: i32, %arg1: memref<1x16x128xf32, #tpu.memory_space<vmem>>, %arg2: memref<16x4xf32, #tpu.memory_space<vmem>>, %arg3: memref<4x16xf32, #tpu.memory_space<vmem>>, %arg4: memref<1x16x128xf32, #tpu.memory_space<vmem>>) attributes {dimension_semantics = [#tpu.dimension_semantics<parallel>], iteration_bounds = array<i64: 2>, scalar_prefetch = 0 : i64, scratch_operands = 0 : i64, tpu.core_type = #tpu.core_type<tc>, window_params = [{transform_indices = @transform_0, window_bounds = array<i64: 1, 16, 128>}, {pipeline_mode = #tpu.pipeline_mode<synchronous>, transform_indices = @transform_1, window_bounds = array<i64: 16, 4>}, {pipeline_mode = #tpu.pipeline_mode<synchronous>, transform_indices = @transform_2, window_bounds = array<i64: 4, 16>}, {transform_indices = @transform_3, window_bounds = array<i64: 1, 16, 128>}]} {
    %c0 = arith.constant 0 : index
    %c0_0 = arith.constant 0 : index
    %c0_1 = arith.constant 0 : index
    %0 = vector.load %arg1[%c0, %c0_0, %c0_1] : memref<1x16x128xf32, #tpu.memory_space<vmem>>, vector<1x16x128xf32>
    %cst = arith.constant dense<0.000000e+00> : vector<1x16xf32>
    %1 = vector.multi_reduction <add>, %0, %cst [2] : vector<1x16x128xf32> to vector<1x16xf32>
    %cst_2 = arith.constant 6.250000e-02 : f32
    %2 = vector.broadcast %cst_2 : f32 to vector<1x16xf32>
    %3 = arith.mulf %1, %2 : vector<1x16xf32>
    %c0_3 = arith.constant 0 : index
    %c0_4 = arith.constant 0 : index
    %4 = vector.load %arg2[%c0_3, %c0_4] : memref<16x4xf32, #tpu.memory_space<vmem>>, vector<16x4xf32>
    %c0_5 = arith.constant 0 : index
    %c0_6 = arith.constant 0 : index
    %5 = vector.load %arg3[%c0_5, %c0_6] : memref<4x16xf32, #tpu.memory_space<vmem>>, vector<4x16xf32>
    %cst_7 = arith.constant dense<0.000000e+00> : vector<1x4xf32>
    %6 = tpu.matmul %3, %4, %cst_7 {dimension_numbers = #tpu.dot_dimension_numbers<[1], [0], [0], [1], [0, 0, 1, 1], [], []>} : vector<1x16xf32>, vector<16x4xf32>, vector<1x4xf32> -> vector<1x4xf32>
    %cst_8 = arith.constant 0.000000e+00 : f32
    %7 = vector.broadcast %cst_8 : f32 to vector<1x4xf32>
    %8 = arith.maximumf %6, %7 : vector<1x4xf32>
    %cst_9 = arith.constant dense<0.000000e+00> : vector<1x16xf32>
    %9 = tpu.matmul %8, %5, %cst_9 {dimension_numbers = #tpu.dot_dimension_numbers<[1], [0], [0], [1], [0, 0, 1, 1], [], []>} : vector<1x4xf32>, vector<4x16xf32>, vector<1x16xf32> -> vector<1x16xf32>
    %10 = arith.negf %9 : vector<1x16xf32>
    %11 = math.exp %10 : vector<1x16xf32>
    %cst_10 = arith.constant 1.000000e+00 : f32
    %12 = vector.broadcast %cst_10 : f32 to vector<1x16xf32>
    %13 = arith.addf %12, %11 : vector<1x16xf32>
    %14 = arith.divf %12, %13 : vector<1x16xf32>
    %15 = vector.shape_cast %14 : vector<1x16xf32> to vector<1x16x1xf32>
    %16 = vector.broadcast %15 : vector<1x16x1xf32> to vector<1x16x128xf32>
    %17 = arith.mulf %0, %16 : vector<1x16x128xf32>
    %c0_11 = arith.constant 0 : index
    %c0_12 = arith.constant 0 : index
    %c0_13 = arith.constant 0 : index
    %18 = vector.load %arg4[%c0_11, %c0_12, %c0_13] : memref<1x16x128xf32, #tpu.memory_space<vmem>>, vector<1x16x128xf32>
    tpu.vector_store %arg4[%c0_11, %c0_12, %c0_13], %17 {strides = array<i32>} : memref<1x16x128xf32, #tpu.memory_space<vmem>>, vector<1x16x128xf32>,
    return
  }
  func.func @transform_0(%arg0: i32) -> (i32, i32, i32) {
    %c0_i32 = arith.constant 0 : i32
    %c0_i32_0 = arith.constant 0 : i32
    %c0_i32_1 = arith.constant 0 : i32
    return %arg0, %c0_i32, %c0_i32_0 : i32, i32, i32
  }
  func.func @transform_1(%arg0: i32) -> (i32, i32) {
    %c0_i32 = arith.constant 0 : i32
    %c0_i32_0 = arith.constant 0 : i32
    %c0_i32_1 = arith.constant 0 : i32
    return %c0_i32, %c0_i32_0 : i32, i32
  }
  func.func @transform_2(%arg0: i32) -> (i32, i32) {
    %c0_i32 = arith.constant 0 : i32
    %c0_i32_0 = arith.constant 0 : i32
    %c0_i32_1 = arith.constant 0 : i32
    return %c0_i32, %c0_i32_0 : i32, i32
  }
  func.func @transform_3(%arg0: i32) -> (i32, i32, i32) {
    %c0_i32 = arith.constant 0 : i32
    %c0_i32_0 = arith.constant 0 : i32
    %c0_i32_1 = arith.constant 0 : i32
    return %arg0, %c0_i32, %c0_i32_0 : i32, i32, i32
  }
}

</mosaic_0001>

<llo_original>
// kernel: tpu_custom_call.1
$region0: #{tpu_custom_call.1}
  #allocation0 [shape = 'u32[]', space=smem, size = 0x4, offset = 0x4, fixed_abs, tag = 'smem constant byte address 0x4 - core index']
  #allocation1 [shape = 'u32[144,128]{1,0:T(1,128)}', space=vmem, size = 0x12000, scoped, tag = 'internal scratch']
  %s0 = inlined_call_operand.hbm [shape: f32[2,16,128], index: 0, kind: input, shape index: {}]
  %s1 = inlined_call_operand.vmem [shape: f32[16,4], index: 1, kind: input, shape index: {}]
  %s2 = inlined_call_operand.vmem [shape: f32[4,16], index: 2, kind: input, shape index: {}]
  %s3 = inlined_call_operand.hbm [shape: f32[2,16,128], index: 3, kind: output, shape index: {}]
  %s4 = sld [smem:[#allocation0]]
  $region49: #{tpu_custom_call.1} parent=0
    _
  %s6 = ssub.s32 1, %s4
  %s7 = scalar_select 0, %s6, %s4
  $region1: #{tpu_custom_call.1} parent=0
    #allocation2 [shape = 'u8[16384]{0}', space=vmem, size = 0x4000, scoped, tag = 'input window, operand 0']
    #allocation3 [shape = 's32[2]{0}', space=sflag, size = 0x8, scoped, tag = 'scoped memory for tpu_custom_call.1']
    #allocation4 [shape = 's32[2]{0}', space=sflag, size = 0x8, scoped, tag = 'scoped memory for tpu_custom_call.1']
    #allocation5 [shape = 'u8[16384]{0}', space=vmem, size = 0x4000, scoped, tag = 'output window, operand 0']
    %8 = vsyncpa [#allocation3], 0
    %s9 = scalar_lea.sflag [#allocation3], 1
    %10 = vsyncpa %s9, 0
    %11 = vsyncpa [#allocation4], 0
    %s12 = scalar_lea.sflag [#allocation4], 1
    %13 = vsyncpa %s12, 0
    loop: start=0, step=1, limit=4
    $region2: #{tpu_custom_call.1} parent=1 // loop_pre_header
      _
    $region3: #{tpu_custom_call.1} parent=1 // loop_header
      %s15 = sphi 0, %s19
      %p16 = scmp.ge.s32.totalorder %s15, 4
      %s25 = sphi 0, %s27
      %s28 = sphi 0, %s25
      %s29 = sphi 0, %s28
      %s45 = sphi 0, %s29
      %s49 = sphi 0, %s49
      %s51 = sphi 0, %s49
      %s52 = sphi 0, %s51
      %s66 = sphi 0, %s52
      %s70 = sphi 0, %s70
      %s72 = sphi 0, %s70
      %s73 = sphi 0, %s72
      %s87 = sphi 0, %s73
      %s93 = sphi 0, %s95
      %s96 = sphi 0, %s93
      %s97 = sphi 0, %s96
      %s113 = sphi 0, %s97
    $region4: #{tpu_custom_call.1} parent=1 // loop_header_branch
      %18 = sbr.rel (%p16) target = $region8
    $region5: #{tpu_custom_call.1} parent=1 // loop_body
      %s20 = ssub.s32 %s15, 1
      %s21 = ssub.s32 %s15, 2
      %s22 = sadd.s32 %s15, 1
      %s23 = ssub.s32 %s15, %s22
      %p24 = scmp.eq.s32.totalorder %s23, 0
      %s26 = sadd.s32 %s25, 1
      %s27 = scalar_select %p24, %s25, %s26
      %p30 = pneg %p24
      %p31 = scmp.eq.s32.totalorder %s15, 1
      %p32 = por %p30, %p31
      %p33 = scmp.ne.s32.totalorder %s25, %s28
      %p34 = scmp.eq.s32.totalorder %s15, 0
      %p35 = por %p33, %p34
      %p36 = scmp.ne.s32.totalorder %s25, %s28
      %p37 = scmp.eq.s32.totalorder %s20, 1
      %p38 = por %p36, %p37
      %p39 = scmp.ne.s32.totalorder %s28, %s29
      %p40 = scmp.eq.s32.totalorder %s20, 0
      %p41 = por %p39, %p40
      %p42 = scmp.ne.s32.totalorder %s28, %s29
      %p43 = scmp.eq.s32.totalorder %s21, 1
      %p44 = por %p42, %p43
      %p46 = scmp.ne.s32.totalorder %s29, %s45
      %p47 = scmp.eq.s32.totalorder %s21, 0
      %p48 = por %p46, %p47
      %s50 = sadd.s32 %s49, 1
      %p53 = scmp.eq.s32.totalorder %s15, 1
      %p54 = scmp.ne.s32.totalorder %s49, %s51
      %p55 = scmp.eq.s32.totalorder %s15, 0
      %p56 = por %p54, %p55
      %p57 = scmp.ne.s32.totalorder %s49, %s51
      %p58 = scmp.eq.s32.totalorder %s20, 1
      %p59 = por %p57, %p58
      %p60 = scmp.ne.s32.totalorder %s51, %s52
      %p61 = scmp.eq.s32.totalorder %s20, 0
      %p62 = por %p60, %p61
      %p63 = scmp.ne.s32.totalorder %s51, %s52
      %p64 = scmp.eq.s32.totalorder %s21, 1
      %p65 = por %p63, %p64
      %p67 = scmp.ne.s32.totalorder %s52, %s66
      %p68 = scmp.eq.s32.totalorder %s21, 0
      %p69 = por %p67, %p68
      %s71 = sadd.s32 %s70, 1
      %p74 = scmp.eq.s32.totalorder %s15, 1
      %p75 = scmp.ne.s32.totalorder %s70, %s72
      %p76 = scmp.eq.s32.totalorder %s15, 0
      %p77 = por %p75, %p76
      %p78 = scmp.ne.s32.totalorder %s70, %s72
      %p79 = scmp.eq.s32.totalorder %s20, 1
      %p80 = por %p78, %p79
      %p81 = scmp.ne.s32.totalorder %s72, %s73
      %p82 = scmp.eq.s32.totalorder %s20, 0
      %p83 = por %p81, %p82
      %p84 = scmp.ne.s32.totalorder %s72, %s73
      %p85 = scmp.eq.s32.totalorder %s21, 1
      %p86 = por %p84, %p85
      %p88 = scmp.ne.s32.totalorder %s73, %s87
      %p89 = scmp.eq.s32.totalorder %s21, 0
      %p90 = por %p88, %p89
      %s91 = ssub.s32 %s15, %s22
      %p92 = scmp.eq.s32.totalorder %s91, 0
      %s94 = sadd.s32 %s93, 1
      %s95 = scalar_select %p92, %s93, %s94
      %p98 = pneg %p92
      %p99 = scmp.eq.s32.totalorder %s15, 1
      %p100 = por %p98, %p99
      %p101 = scmp.ne.s32.totalorder %s93, %s96
      %p102 = scmp.eq.s32.totalorder %s15, 0
      %p103 = por %p101, %p102
      %p104 = scmp.ne.s32.totalorder %s93, %s96
      %p105 = scmp.eq.s32.totalorder %s20, 1
      %p106 = por %p104, %p105
      %p107 = scmp.ne.s32.totalorder %s96, %s97
      %p108 = scmp.eq.s32.totalorder %s20, 0
      %p109 = por %p107, %p108
      %p110 = scmp.ne.s32.totalorder %s96, %s97
      %p111 = scmp.eq.s32.totalorder %s21, 1
      %p112 = por %p110, %p111
      %p114 = scmp.ne.s32.totalorder %s97, %s113
      %p115 = scmp.eq.s32.totalorder %s21, 0
      %p116 = por %p114, %p115
      %p117 = scmp.le.s32.totalorder 1, %s15
      %p118 = scmp.lt.s32.totalorder %s15, 3
      %p119 = pnand %p117, %p118
      %p120 = pneg %p119
      // Predicated region
      $region9: #{tpu_custom_call.1} parent=5 // pred_check
        _
      $region10: #{tpu_custom_call.1} parent=5 // pred_check_branch
        %122 = sbr.rel (%p119) target = $region12
      $region11: #{tpu_custom_call.1} parent=5 // pred_region
        %s123 = ssub.s32 %s15, 1
        // Predicated region
        $region13: #{tpu_custom_call.1} parent=11 // pred_check
          %p124 = pneg %p62
        $region14: #{tpu_custom_call.1} parent=11 // pred_check_branch
          %126 = sbr.rel (%p124) target = $region16
        $region15: #{tpu_custom_call.1} parent=11 // pred_region
          _
        $region16: #{tpu_custom_call.1} parent=11 // pred_fallthru
          _
        // Predicated region
        $region17: #{tpu_custom_call.1} parent=11 // pred_check
          %p127 = pneg %p83
        $region18: #{tpu_custom_call.1} parent=11 // pred_check_branch
          %129 = sbr.rel (%p127) target = $region20
        $region19: #{tpu_custom_call.1} parent=11 // pred_region
          _
        $region20: #{tpu_custom_call.1} parent=11 // pred_fallthru
          _
      $region12: #{tpu_custom_call.1} parent=5 // pred_fallthru
        _
      %p130 = scmp.lt.s32.totalorder %s15, 2
      // Predicated region
      $region21: #{tpu_custom_call.1} parent=5 // pred_check
        %p131 = pneg %p130
      $region22: #{tpu_custom_call.1} parent=5 // pred_check_branch
        %133 = sbr.rel (%p131) target = $region24
      $region23: #{tpu_custom_call.1} parent=5 // pred_region
        // Predicated region
        $region25: #{tpu_custom_call.1} parent=23 // pred_check
          %p134 = pneg %p35
        $region26: #{tpu_custom_call.1} parent=23 // pred_check_branch
          %136 = sbr.rel (%p134) target = $region28
        $region27: #{tpu_custom_call.1} parent=23 // pred_region
          %s137 = sand.u32 %s25, 1
          %s138 = scalar_lea.sflag [#allocation3], %s137
          %s139 = sand.u32 %s25, 1
          %s140 = smul.addr %s139, 16
          %s141 = scalar_lea.vmem [#allocation2], %s140
          %s143 = ssub.s32 256, 256
          %144 = vsyncadd %s138, %s143
          %s145 = smul.addr %s15, 2
          %s146 = smul.addr %s145, 128
          %s147 = scalar_lea.hbm %s0, %s146
          %s148 = sshll.u32 %s141, 4
          %s149 = int_to_ptr.vmem [resolvable:$true] %s148
          %154 = dma.hbm_to_vmem [thread:$0]  %s147, 256, %s149, %s138, 128, 128, 8
        $region28: #{tpu_custom_call.1} parent=23 // pred_fallthru
          _
      $region24: #{tpu_custom_call.1} parent=5 // pred_fallthru
        _
      %p155 = scmp.le.s32.totalorder 1, %s15
      %p156 = scmp.lt.s32.totalorder %s15, 3
      %p157 = pnand %p155, %p156
      %p158 = pneg %p157
      // Predicated region
      $region29: #{tpu_custom_call.1} parent=5 // pred_check
        _
      $region30: #{tpu_custom_call.1} parent=5 // pred_check_branch
        %160 = sbr.rel (%p157) target = $region32
      $region31: #{tpu_custom_call.1} parent=5 // pred_region
        %s161 = ssub.s32 %s15, 1
        %s162 = sand.u32 %s28, 1
        %s163 = scalar_lea.sflag [#allocation3], %s162
        %s164 = sand.u32 %s28, 1
        %s165 = smul.addr %s164, 16
        %s166 = scalar_lea.vmem [#allocation2], %s165
        // Predicated region
        $region33: #{tpu_custom_call.1} parent=31 // pred_check
          %p167 = pneg %p41
        $region34: #{tpu_custom_call.1} parent=31 // pred_check_branch
          %169 = sbr.rel (%p167) target = $region36
        $region35: #{tpu_custom_call.1} parent=31 // pred_region
          %170 = dma.done %s163, 256
        $region36: #{tpu_custom_call.1} parent=31 // pred_fallthru
          _
        %s171 = sand.u32 %s28, 1
        %s172 = scalar_lea.sflag [#allocation3], %s171
        %s173 = sand.u32 %s28, 1
        %s174 = smul.addr %s173, 16
        %s175 = scalar_lea.vmem [#allocation2], %s174
        %p176 = pneg %p41
        %p177 = pneg %p38
        %p178 = pneg %p62
        %p179 = pneg %p59
        %p180 = pneg %p83
        %p181 = pneg %p80
        %p182 = pneg %p109
        %p183 = pneg %p106
        %s184 = sand.u32 %s96, 1
        %s185 = scalar_lea.sflag [#allocation4], %s184
        %s186 = sand.u32 %s96, 1
        %s187 = smul.addr %s186, 16
        %s188 = scalar_lea.vmem [#allocation5], %s187
        %v189 = vld [vmem:[%s166] sm:$0xff]
        %v190 = vld [vmem:[%s166 + $0x8] sm:$0xff]
        %191 = vadd.xlane.f32.xlu0 %v189
        %v192 = vpop.xlane.xlu0 %191
        %193 = vadd.xlane.f32.xlu0 %v190
        %v194 = vpop.xlane.xlu0 %193
        %v195 = vmul.f32 %v192, 0.0625
        %v196 = vmul.f32 %v194, 0.0625
        %v197 = vld [vmem:[%s1] sm:$0xff]
        %v198 = vld [vmem:[%s1 + $0x8] sm:$0xff]
        %v199 = vld [vmem:[%s2] sm:$0xf]
        %v202 = vlaneseq
        %v203 = vand.u32 %v202, 127
        %v204 = vlaneseq
        %v205 = vshrl.u32 %v204, 7
        %v206 = vsub.s32 %v203, %v205
        %v207 = vrot.slane %v195, %v206
        %v208 = vadd.s32 %v203, 4294967288
        %v209 = vlaneseq
        %v210 = vshrl.u32 %v209, 7
        %v211 = vsub.s32 %v208, %v210
        %v212 = vrot.slane %v196, %v211
        %vm213 = vcmask 130112
        %v214 = vsel %vm213, %v212, %v207
        %vm215 = vcmask 130048
        %v216 = vsel %vm215, %v214, 0
        %218 = vmatprep.subr.mxu0 0.0
        %219 = vmatpush1.msra.mxu0 %v197
        %220 = vmatprep.subr.mxu0 0.0
        %221 = vmatpush1.msra.mxu0 %v198
        %222 = vmatprep.subr.mxu0 0.0
        %223 = vmatpush1.msra.mxu0 0.0
        %224 = vmatprep.subr.mxu0 0.0
        %225 = vmatpush1.msra.mxu0 0.0
        %226 = vmatprep.subr.mxu0 0.0
        %227 = vmatpush1.msra.mxu0 0.0
        %228 = vmatprep.subr.mxu0 0.0
        %229 = vmatpush1.msra.mxu0 0.0
        %230 = vmatprep.subr.mxu0 0.0
        %231 = vmatpush1.msra.mxu0 0.0
        %232 = vmatprep.subr.mxu0 0.0
        %233 = vmatpush1.msra.mxu0 0.0
        %234 = vmatprep.subr.mxu0 0.0
        %235 = vmatpush1.msra.mxu0 0.0
        %236 = vmatprep.subr.mxu0 0.0
        %237 = vmatpush1.msra.mxu0 0.0
        %238 = vmatprep.subr.mxu0 0.0
        %239 = vmatpush1.msra.mxu0 0.0
        %240 = vmatprep.subr.mxu0 0.0
        %241 = vmatpush1.msra.mxu0 0.0
        %242 = vmatprep.subr.mxu0 0.0
        %243 = vmatpush1.msra.mxu0 0.0
        %244 = vmatprep.subr.mxu0 0.0
        %245 = vmatpush1.msra.mxu0 0.0
        %246 = vmatprep.subr.mxu0 0.0
        %247 = vmatpush1.msra.mxu0 0.0
        %248 = vmatprep.subr.mxu0 0.0
        %249 = vmatpush1.msra.mxu0 0.0
        %250 = vmatprep.subr.mxu0 0.0
        %251 = vmatpush1.msra.mxu0 0.0
        %252 = vmatprep.subr.mxu0 0.0
        %253 = vmatpush1.msra.mxu0 0.0
        %254 = vmatprep.subr.mxu0 0.0
        %255 = vmatpush1.msra.mxu0 0.0
        %256 = vmatprep.subr.mxu0 0.0
        %257 = vmatpush1.msra.mxu0 0.0
        %258 = vmatprep.subr.mxu0 0.0
        %259 = vmatpush1.msra.mxu0 0.0
        %260 = vmatprep.subr.mxu0 0.0
        %261 = vmatpush1.msra.mxu0 0.0
        %262 = vmatprep.subr.mxu0 0.0
        %263 = vmatpush1.msra.mxu0 0.0
        %264 = vmatprep.subr.mxu0 0.0
        %265 = vmatpush1.msra.mxu0 0.0
        %266 = vmatprep.subr.mxu0 0.0
        %267 = vmatpush1.msra.mxu0 0.0
        %268 = vmatprep.subr.mxu0 0.0
        %269 = vmatpush1.msra.mxu0 0.0
        %270 = vmatprep.subr.mxu0 0.0
        %271 = vmatpush1.msra.mxu0 0.0
        %272 = vmatprep.subr.mxu0 0.0
        %273 = vmatpush1.msra.mxu0 0.0
        %274 = vmatprep.subr.mxu0 0.0
        %275 = vmatpush1.msra.mxu0 0.0
        %276 = vmatprep.subr.mxu0 0.0
        %277 = vmatpush1.msra.mxu0 0.0
        %278 = vmatprep.subr.mxu0 0.0
        %279 = vmatpush1.msra.mxu0 0.0
        %280 = vmatprep.subr.mxu0 0.0
        %281 = vmatpush1.msra.mxu0 0.0
        %282 = vmatprep.mubr.f32.mxu0 0.0
        %283 = vmatmul.mubr.f32.gmra.mrb[0].mxu0 %v216
        %v284 = vpop.f32.mrb[0].mxu0
        %v285 = vadd.f32 0.0, %v284
        %v286 = vpop.f32.mrb[0].mxu0
        %287 = vdwg.mxu0
        %v288 = vmax.f32 %v285, 0.0
        %vm289 = vcmask 31744
        %v291 = vsel %vm289, %v288, 0
        %vm293 = vcmask 1043456
        %v295 = vsel %vm293, %v199, 0
        %297 = vmatprep.subr.mxu0 0.0
        %298 = vmatpush1.msra.mxu0 %v295
        %299 = vmatprep.subr.mxu0 0.0
        %300 = vmatpush1.msra.mxu0 0.0
        %301 = vmatprep.subr.mxu0 0.0
        %302 = vmatpush1.msra.mxu0 0.0
        %303 = vmatprep.subr.mxu0 0.0
        %304 = vmatpush1.msra.mxu0 0.0
        %305 = vmatprep.subr.mxu0 0.0
        %306 = vmatpush1.msra.mxu0 0.0
        %307 = vmatprep.subr.mxu0 0.0
        %308 = vmatpush1.msra.mxu0 0.0
        %309 = vmatprep.subr.mxu0 0.0
        %310 = vmatpush1.msra.mxu0 0.0
        %311 = vmatprep.subr.mxu0 0.0
        %312 = vmatpush1.msra.mxu0 0.0
        %313 = vmatprep.subr.mxu0 0.0
        %314 = vmatpush1.msra.mxu0 0.0
        %315 = vmatprep.subr.mxu0 0.0
        %316 = vmatpush1.msra.mxu0 0.0
        %317 = vmatprep.subr.mxu0 0.0
        %318 = vmatpush1.msra.mxu0 0.0
        %319 = vmatprep.subr.mxu0 0.0
        %320 = vmatpush1.msra.mxu0 0.0
        %321 = vmatprep.subr.mxu0 0.0
        %322 = vmatpush1.msra.mxu0 0.0
        %323 = vmatprep.subr.mxu0 0.0
        %324 = vmatpush1.msra.mxu0 0.0
        %325 = vmatprep.subr.mxu0 0.0
        %326 = vmatpush1.msra.mxu0 0.0
        %327 = vmatprep.subr.mxu0 0.0
        %328 = vmatpush1.msra.mxu0 0.0
        %329 = vmatprep.subr.mxu0 0.0
        %330 = vmatpush1.msra.mxu0 0.0
        %331 = vmatprep.subr.mxu0 0.0
        %332 = vmatpush1.msra.mxu0 0.0
        %333 = vmatprep.subr.mxu0 0.0
        %334 = vmatpush1.msra.mxu0 0.0
        %335 = vmatprep.subr.mxu0 0.0
        %336 = vmatpush1.msra.mxu0 0.0
        %337 = vmatprep.subr.mxu0 0.0
        %338 = vmatpush1.msra.mxu0 0.0
        %339 = vmatprep.subr.mxu0 0.0
        %340 = vmatpush1.msra.mxu0 0.0
        %341 = vmatprep.subr.mxu0 0.0
        %342 = vmatpush1.msra.mxu0 0.0
        %343 = vmatprep.subr.mxu0 0.0
        %344 = vmatpush1.msra.mxu0 0.0
        %345 = vmatprep.subr.mxu0 0.0
        %346 = vmatpush1.msra.mxu0 0.0
        %347 = vmatprep.subr.mxu0 0.0
        %348 = vmatpush1.msra.mxu0 0.0
        %349 = vmatprep.subr.mxu0 0.0
        %350 = vmatpush1.msra.mxu0 0.0
        %351 = vmatprep.subr.mxu0 0.0
        %352 = vmatpush1.msra.mxu0 0.0
        %353 = vmatprep.subr.mxu0 0.0
        %354 = vmatpush1.msra.mxu0 0.0
        %355 = vmatprep.subr.mxu0 0.0
        %356 = vmatpush1.msra.mxu0 0.0
        %357 = vmatprep.subr.mxu0 0.0
        %358 = vmatpush1.msra.mxu0 0.0
        %359 = vmatprep.subr.mxu0 0.0
        %360 = vmatpush1.msra.mxu0 0.0
        %361 = vmatprep.mubr.f32.mxu0 0.0
        %362 = vmatmul.mubr.f32.gmra.mrb[0].mxu0 %v291
        %v363 = vpop.f32.mrb[0].mxu0
        %v364 = vadd.f32 0.0, %v363
        %v365 = vpop.f32.mrb[0].mxu0
        %366 = vdwg.mxu0
        %v367 = vxor.u32 %v364, 2147483648
        %v368 = vmul.f32 %v367, 1.442695
        %v369 = vpow.pop %v368
        %v370 = vadd.f32 %v369, 1.0
        %v371 = vrcp.pop %v370
        %v372 = vmul.f32 1.0, %v371
        %v373 = vlaneseq
        %v374 = vshrl.u32 %v373, 7
        %v375 = vsub.s32 0, %v374
        %v376 = vrot.slane %v372, %v375
        %378 = vbcast.lane.b32.xlu0 %v376, 256
        %v379 = vpop.permute.xlu0 %378
        %s381 = sor.u32 256, 8
        %382 = vbcast.lane.b32.xlu0 %v376, %s381
        %v383 = vpop.permute.xlu0 %382
        %v384 = vmul.f32 %v189, %v379
        %v385 = vmul.f32 %v190, %v383
        %386 = vst [vmem:[%s188] sm:$0xff] %v384
        %387 = vst [vmem:[%s188 + $0x8] sm:$0xff] %v385
        %s388 = sand.u32 %s96, 1
        %s389 = scalar_lea.sflag [#allocation4], %s388
        %s390 = sand.u32 %s96, 1
        %s391 = smul.addr %s390, 16
        %s392 = scalar_lea.vmem [#allocation5], %s391
        // Predicated region
        $region37: #{tpu_custom_call.1} parent=31 // pred_check
          %p393 = pneg %p106
        $region38: #{tpu_custom_call.1} parent=31 // pred_check_branch
          %395 = sbr.rel (%p393) target = $region40
        $region39: #{tpu_custom_call.1} parent=31 // pred_region
          %s397 = ssub.s32 256, 256
          %398 = vsyncadd %s389, %s397
          %s399 = smul.addr %s20, 2
          %s400 = smul.addr %s399, 128
          %s401 = scalar_lea.hbm %s3, %s400
          %s402 = sshll.u32 %s392, 4
          %s403 = int_to_ptr.vmem [resolvable:$true] %s402
          %408 = dma.vmem_to_hbm [thread:$0]  %s403, 256, %s401, %s389, 128, 128, 8
        $region40: #{tpu_custom_call.1} parent=31 // pred_fallthru
          _
      $region32: #{tpu_custom_call.1} parent=5 // pred_fallthru
        _
      %p409 = scmp.le.s32.totalorder 2, %s15
      // Predicated region
      $region41: #{tpu_custom_call.1} parent=5 // pred_check
        %p410 = pneg %p409
      $region42: #{tpu_custom_call.1} parent=5 // pred_check_branch
        %412 = sbr.rel (%p410) target = $region44
      $region43: #{tpu_custom_call.1} parent=5 // pred_region
        %s413 = ssub.s32 %s15, 2
        // Predicated region
        $region45: #{tpu_custom_call.1} parent=43 // pred_check
          %p414 = pneg %p112
        $region46: #{tpu_custom_call.1} parent=43 // pred_check_branch
          %416 = sbr.rel (%p414) target = $region48
        $region47: #{tpu_custom_call.1} parent=43 // pred_region
          %s417 = sand.u32 %s97, 1
          %s418 = scalar_lea.sflag [#allocation4], %s417
          %s419 = sand.u32 %s97, 1
          %s420 = smul.addr %s419, 16
          %s421 = scalar_lea.vmem [#allocation5], %s420
          %422 = dma.done %s418, 256
        $region48: #{tpu_custom_call.1} parent=43 // pred_fallthru
          _
      $region44: #{tpu_custom_call.1} parent=5 // pred_fallthru
        _
    $region6: #{tpu_custom_call.1} parent=1 // loop_footer
      %s19 = sadd.s32 1, %s15
    $region7: #{tpu_custom_call.1} parent=1 // loop_footer_branch
      %14 = sbr.rel target = $region3
    $region8: #{tpu_custom_call.1} parent=1 // loop_exit
      _
    %423 = vsyncpa [#allocation3], 1
    %s424 = scalar_lea.sflag [#allocation3], 1
    %425 = vsyncpa %s424, 1
    %426 = vsyncpa [#allocation4], 1
    %s427 = scalar_lea.sflag [#allocation4], 1
    %428 = vsyncpa %s427, 1

</llo_original>
